<compile_context>
chip_gen: v6e
topology: v6e:2x2x1
jax: 0.10.0
libtpu: 0.0.40
codegen_flags: <defaults>
</compile_context>

<pallas_src>
import functools

import jax
import jax.numpy as jnp
from jax.experimental import pallas as pl
from jax.experimental.pallas import tpu as pltpu


def _choose_tile_l(L: int, cap: int = 8192) -> int:
    """Largest lane tile: full L if small or ragged, else a multiple of 128
    that divides L and is <= cap."""
    if L <= cap or L % 128 != 0:
        return L
    t = (cap // 128) * 128
    while t >= 128:
        if L % t == 0:
            return t
        t -= 128
    return L


def _circconv_kernel(x_ref, w_ref, b_ref, o_ref, *, K, dilation, pad,
                     tile_l, num_tiles):
    # x_ref: (C_in, L + 2*pad)   circular-padded input row of this batch elem
    # w_ref: (K, C_out, C_in)    per-tap weight matrices
    # b_ref: (C_out, 1)          bias column
    # o_ref: (C_out, tile_l)     output tile
    if num_tiles == 1:
        window = x_ref[...]                          # (C_in, tile_l + 2*pad)
    else:
        base = pl.program_id(1) * tile_l
        if tile_l % 128 == 0:
            base = pl.multiple_of(base, 128)
        window = x_ref[:, pl.ds(base, tile_l + 2 * pad)]

    w = w_ref[...]                                   # (K, C_out, C_in)
    # In-kernel im2col: accumulate K shifted-slice matmuls in f32.
    acc = jnp.dot(w[0], window[:, 0:tile_l],
                  preferred_element_type=jnp.float32)
    for k in range(1, K):                            # K is small and static
        acc += jnp.dot(w[k], window[:, k * dilation:k * dilation + tile_l],
                       preferred_element_type=jnp.float32)
    # Bias folded into the epilogue (no broadcast_to temp).
    o_ref[...] = (acc + b_ref[...]).astype(o_ref.dtype)


def dilated_circ_conv(x, weight, bias, *, n_adj: int, dilation: int):
    """Forward pass matching DilatedCircConv.forward(input, adj).

    x:      (B, C_in, L)        float32
    weight: (C_out, C_in, K)    K = 2*n_adj + 1 (nn.Conv1d layout)
    bias:   (C_out,)
    returns (B, C_out, L)
    """
    B, C_in, L = x.shape
    C_out, C_in_w, K = weight.shape
    assert C_in_w == C_in
    assert K == 2 * n_adj + 1

    pad = n_adj * dilation
    # Circular wrap via slicing is only well-defined for pad <= L (same
    # implicit contract as the PyTorch module's tensor slicing).
    assert pad <= L, "n_adj * dilation must be <= L for circular padding"

    # --- glue: circular padding along the length axis (same as torch.cat).
    # This is the only wrapper-side copy (~|x| bytes); im2col is in-kernel.
    if n_adj != 0:
        x_pad = jnp.concatenate([x[..., -pad:], x, x[..., :pad]], axis=2)
    else:
        x_pad = x
    Lp = L + 2 * pad

    # Weight as (K, C_out, C_in): tap k is a contiguous (C_out, C_in) matrix.
    w_taps = jnp.transpose(weight, (2, 0, 1))
    b_col = bias.reshape(C_out, 1)

    tile_l = _choose_tile_l(L)
    num_tiles = L // tile_l

    # Explicit VMEM budget (double-buffered blocks + headroom), clamped to a
    # range that is valid on v5e/v6e/v7x.  NOTE: the whole padded row of one
    # batch element stays VMEM-resident; for extremely large C_in*L this
    # should switch to a manual halo'd make_async_copy stream (not needed at
    # these sizes).
    itemsize = x.dtype.itemsize
    blk_bytes = (C_in * Lp + K * C_out * C_in + C_out
                 + C_out * tile_l) * itemsize
    vmem_limit = int(min(max(8 * blk_bytes, 16 << 20), 48 << 20))

    kernel = functools.partial(_circconv_kernel, K=K, dilation=dilation,
                               pad=pad, tile_l=tile_l, num_tiles=num_tiles)

    out = pl.pallas_call(
        kernel,
        out_shape=jax.ShapeDtypeStruct((B, C_out, L), x.dtype),
        grid_spec=pltpu.PrefetchScalarGridSpec(
            num_scalar_prefetch=0,
            grid=(B, num_tiles),
            in_specs=[
                # Whole padded row per batch element; re-DMA'd only when the
                # batch index changes (reused across all L tiles).
                pl.BlockSpec((None, C_in, Lp), lambda b, t: (b, 0, 0)),
                pl.BlockSpec((K, C_out, C_in), lambda b, t: (0, 0, 0)),
                pl.BlockSpec((C_out, 1), lambda b, t: (0, 0)),
            ],
            out_specs=pl.BlockSpec((None, C_out, tile_l),
                                   lambda b, t: (b, 0, t)),
        ),
        compiler_params=pltpu.CompilerParams(
            # Both axes write disjoint output blocks -> always parallel
            # (lets v7x use both TensorCores even for small grids).
            dimension_semantics=("parallel", "parallel"),
            vmem_limit_bytes=vmem_limit,
        ),
    )(x_pad, w_taps, b_col)
    return out


def _reference(x, weight, bias, *, n_adj, dilation):
    """Pure-JAX reference (circular pad + dilated conv1d)."""
    pad = n_adj * dilation
    if n_adj != 0:
        x_pad = jnp.concatenate([x[..., -pad:], x, x[..., :pad]], axis=2)
    else:
        x_pad = x
    out = jax.lax.conv_general_dilated(
        x_pad, weight,
        window_strides=(1,),
        padding="VALID",
        rhs_dilation=(dilation,),
        dimension_numbers=("NCH", "OIH", "NCH"),
    )
    return out + bias[None, :, None]


if __name__ == "__main__":
    key = jax.random.PRNGKey(0)
    kx, kw1, kw2, kb = jax.random.split(key, 4)

    # Small shapes consistent with the module: state_dim=4 channels, length=16.
    B, C_in, C_out, L = 2, 4, 4, 16
    x = jax.random.normal(kx, (B, C_in, L), dtype=jnp.float32)
    bias = jax.random.normal(kb, (C_out,), dtype=jnp.float32) * 0.1

    # Config 1: module defaults (n_adj=4, dilation=1 -> kernel_size=9).
    n_adj1, dil1 = 4, 1
    w1 = jax.random.normal(kw1, (C_out, C_in, 2 * n_adj1 + 1),
                           dtype=jnp.float32) * 0.1
    out1 = jax.block_until_ready(
        dilated_circ_conv(x, w1, bias, n_adj=n_adj1, dilation=dil1))
    ref1 = _reference(x, w1, bias, n_adj=n_adj1, dilation=dil1)
    assert out1.shape == (B, C_out, L)
    assert jnp.allclose(out1, ref1, atol=1e-5, rtol=1e-5)

    # Config 2: dilated case (n_adj=2, dilation=2 -> kernel_size=5, pad=4<=L).
    n_adj2, dil2 = 2, 2
    w2 = jax.random.normal(kw2, (C_out, C_in, 2 * n_adj2 + 1),
                           dtype=jnp.float32) * 0.1
    out2 = jax.block_until_ready(
        dilated_circ_conv(x, w2, bias, n_adj=n_adj2, dilation=dil2))
    ref2 = _reference(x, w2, bias, n_adj=n_adj2, dilation=dil2)
    assert out2.shape == (B, C_out, L)
    assert jnp.allclose(out2, ref2, atol=1e-5, rtol=1e-5)

    print("KERNEL_OK")
</pallas_src>

<mosaic_0001>
module attributes {stable_mosaic.version = 11 : i64} {
  func.func @_circconv_kernel(%arg0: i32, %arg1: i32, %arg2: memref<1x4x24xf32, #tpu.memory_space<vmem>>, %arg3: memref<9x4x4xf32, #tpu.memory_space<vmem>>, %arg4: memref<4x1xf32, #tpu.memory_space<vmem>>, %arg5: memref<1x4x16xf32, #tpu.memory_space<vmem>>) attributes {dimension_semantics = [#tpu.dimension_semantics<parallel>, #tpu.dimension_semantics<parallel>], iteration_bounds = array<i64: 2, 1>, scalar_prefetch = 0 : i64, scratch_operands = 0 : i64, tpu.core_type = #tpu.core_type<tc>, window_params = [{transform_indices = @transform_0, window_bounds = array<i64: 1, 4, 24>}, {pipeline_mode = #tpu.pipeline_mode<synchronous>, transform_indices = @transform_1, window_bounds = array<i64: 9, 4, 4>}, {pipeline_mode = #tpu.pipeline_mode<synchronous>, transform_indices = @transform_2, window_bounds = array<i64: 4, 1>}, {transform_indices = @transform_3, window_bounds = array<i64: 1, 4, 16>}]} {
    %c0 = arith.constant 0 : index
    %c0_0 = arith.constant 0 : index
    %c0_1 = arith.constant 0 : index
    %0 = vector.load %arg2[%c0, %c0_0, %c0_1] : memref<1x4x24xf32, #tpu.memory_space<vmem>>, vector<1x4x24xf32>
    %1 = vector.shape_cast %0 : vector<1x4x24xf32> to vector<4x24xf32>
    %c0_2 = arith.constant 0 : index
    %c0_3 = arith.constant 0 : index
    %c0_4 = arith.constant 0 : index
    %2 = vector.load %arg3[%c0_2, %c0_3, %c0_4] : memref<9x4x4xf32, #tpu.memory_space<vmem>>, vector<9x4x4xf32>
    %3 = vector.extract_strided_slice %2 {offsets = [0, 0, 0], sizes = [1, 4, 4], strides = [1, 1, 1]} : vector<9x4x4xf32> to vector<1x4x4xf32>
    %4 = vector.shape_cast %3 : vector<1x4x4xf32> to vector<4x4xf32>
    %5 = vector.extract_strided_slice %1 {offsets = [0, 0], sizes = [4, 16], strides = [1, 1]} : vector<4x24xf32> to vector<4x16xf32>
    %cst = arith.constant dense<0.000000e+00> : vector<4x16xf32>
    %6 = tpu.matmul %4, %5, %cst {dimension_numbers = #tpu.dot_dimension_numbers<[1], [0], [0], [1], [0, 0, 1, 1], [], []>} : vector<4x4xf32>, vector<4x16xf32>, vector<4x16xf32> -> vector<4x16xf32>
    %7 = vector.extract_strided_slice %2 {offsets = [1, 0, 0], sizes = [1, 4, 4], strides = [1, 1, 1]} : vector<9x4x4xf32> to vector<1x4x4xf32>
    %8 = vector.shape_cast %7 : vector<1x4x4xf32> to vector<4x4xf32>
    %9 = vector.extract_strided_slice %1 {offsets = [0, 1], sizes = [4, 16], strides = [1, 1]} : vector<4x24xf32> to vector<4x16xf32>
    %cst_5 = arith.constant dense<0.000000e+00> : vector<4x16xf32>
    %10 = tpu.matmul %8, %9, %cst_5 {dimension_numbers = #tpu.dot_dimension_numbers<[1], [0], [0], [1], [0, 0, 1, 1], [], []>} : vector<4x4xf32>, vector<4x16xf32>, vector<4x16xf32> -> vector<4x16xf32>
    %11 = arith.addf %6, %10 : vector<4x16xf32>
    %12 = vector.extract_strided_slice %2 {offsets = [2, 0, 0], sizes = [1, 4, 4], strides = [1, 1, 1]} : vector<9x4x4xf32> to vector<1x4x4xf32>
    %13 = vector.shape_cast %12 : vector<1x4x4xf32> to vector<4x4xf32>
    %14 = vector.extract_strided_slice %1 {offsets = [0, 2], sizes = [4, 16], strides = [1, 1]} : vector<4x24xf32> to vector<4x16xf32>
    %cst_6 = arith.constant dense<0.000000e+00> : vector<4x16xf32>
    %15 = tpu.matmul %13, %14, %cst_6 {dimension_numbers = #tpu.dot_dimension_numbers<[1], [0], [0], [1], [0, 0, 1, 1], [], []>} : vector<4x4xf32>, vector<4x16xf32>, vector<4x16xf32> -> vector<4x16xf32>
    %16 = arith.addf %11, %15 : vector<4x16xf32>
    %17 = vector.extract_strided_slice %2 {offsets = [3, 0, 0], sizes = [1, 4, 4], strides = [1, 1, 1]} : vector<9x4x4xf32> to vector<1x4x4xf32>
    %18 = vector.shape_cast %17 : vector<1x4x4xf32> to vector<4x4xf32>
    %19 = vector.extract_strided_slice %1 {offsets = [0, 3], sizes = [4, 16], strides = [1, 1]} : vector<4x24xf32> to vector<4x16xf32>
    %cst_7 = arith.constant dense<0.000000e+00> : vector<4x16xf32>
    %20 = tpu.matmul %18, %19, %cst_7 {dimension_numbers = #tpu.dot_dimension_numbers<[1], [0], [0], [1], [0, 0, 1, 1], [], []>} : vector<4x4xf32>, vector<4x16xf32>, vector<4x16xf32> -> vector<4x16xf32>
    %21 = arith.addf %16, %20 : vector<4x16xf32>
    %22 = vector.extract_strided_slice %2 {offsets = [4, 0, 0], sizes = [1, 4, 4], strides = [1, 1, 1]} : vector<9x4x4xf32> to vector<1x4x4xf32>
    %23 = vector.shape_cast %22 : vector<1x4x4xf32> to vector<4x4xf32>
    %24 = vector.extract_strided_slice %1 {offsets = [0, 4], sizes = [4, 16], strides = [1, 1]} : vector<4x24xf32> to vector<4x16xf32>
    %cst_8 = arith.constant dense<0.000000e+00> : vector<4x16xf32>
    %25 = tpu.matmul %23, %24, %cst_8 {dimension_numbers = #tpu.dot_dimension_numbers<[1], [0], [0], [1], [0, 0, 1, 1], [], []>} : vector<4x4xf32>, vector<4x16xf32>, vector<4x16xf32> -> vector<4x16xf32>
    %26 = arith.addf %21, %25 : vector<4x16xf32>
    %27 = vector.extract_strided_slice %2 {offsets = [5, 0, 0], sizes = [1, 4, 4], strides = [1, 1, 1]} : vector<9x4x4xf32> to vector<1x4x4xf32>
    %28 = vector.shape_cast %27 : vector<1x4x4xf32> to vector<4x4xf32>
    %29 = vector.extract_strided_slice %1 {offsets = [0, 5], sizes = [4, 16], strides = [1, 1]} : vector<4x24xf32> to vector<4x16xf32>
    %cst_9 = arith.constant dense<0.000000e+00> : vector<4x16xf32>
    %30 = tpu.matmul %28, %29, %cst_9 {dimension_numbers = #tpu.dot_dimension_numbers<[1], [0], [0], [1], [0, 0, 1, 1], [], []>} : vector<4x4xf32>, vector<4x16xf32>, vector<4x16xf32> -> vector<4x16xf32>
    %31 = arith.addf %26, %30 : vector<4x16xf32>
    %32 = vector.extract_strided_slice %2 {offsets = [6, 0, 0], sizes = [1, 4, 4], strides = [1, 1, 1]} : vector<9x4x4xf32> to vector<1x4x4xf32>
    %33 = vector.shape_cast %32 : vector<1x4x4xf32> to vector<4x4xf32>
    %34 = vector.extract_strided_slice %1 {offsets = [0, 6], sizes = [4, 16], strides = [1, 1]} : vector<4x24xf32> to vector<4x16xf32>
    %cst_10 = arith.constant dense<0.000000e+00> : vector<4x16xf32>
    %35 = tpu.matmul %33, %34, %cst_10 {dimension_numbers = #tpu.dot_dimension_numbers<[1], [0], [0], [1], [0, 0, 1, 1], [], []>} : vector<4x4xf32>, vector<4x16xf32>, vector<4x16xf32> -> vector<4x16xf32>
    %36 = arith.addf %31, %35 : vector<4x16xf32>
    %37 = vector.extract_strided_slice %2 {offsets = [7, 0, 0], sizes = [1, 4, 4], strides = [1, 1, 1]} : vector<9x4x4xf32> to vector<1x4x4xf32>
    %38 = vector.shape_cast %37 : vector<1x4x4xf32> to vector<4x4xf32>
    %39 = vector.extract_strided_slice %1 {offsets = [0, 7], sizes = [4, 16], strides = [1, 1]} : vector<4x24xf32> to vector<4x16xf32>
    %cst_11 = arith.constant dense<0.000000e+00> : vector<4x16xf32>
    %40 = tpu.matmul %38, %39, %cst_11 {dimension_numbers = #tpu.dot_dimension_numbers<[1], [0], [0], [1], [0, 0, 1, 1], [], []>} : vector<4x4xf32>, vector<4x16xf32>, vector<4x16xf32> -> vector<4x16xf32>
    %41 = arith.addf %36, %40 : vector<4x16xf32>
    %42 = vector.extract_strided_slice %2 {offsets = [8, 0, 0], sizes = [1, 4, 4], strides = [1, 1, 1]} : vector<9x4x4xf32> to vector<1x4x4xf32>
    %43 = vector.shape_cast %42 : vector<1x4x4xf32> to vector<4x4xf32>
    %44 = vector.extract_strided_slice %1 {offsets = [0, 8], sizes = [4, 16], strides = [1, 1]} : vector<4x24xf32> to vector<4x16xf32>
    %cst_12 = arith.constant dense<0.000000e+00> : vector<4x16xf32>
    %45 = tpu.matmul %43, %44, %cst_12 {dimension_numbers = #tpu.dot_dimension_numbers<[1], [0], [0], [1], [0, 0, 1, 1], [], []>} : vector<4x4xf32>, vector<4x16xf32>, vector<4x16xf32> -> vector<4x16xf32>
    %46 = arith.addf %41, %45 : vector<4x16xf32>
    %c0_13 = arith.constant 0 : index
    %c0_14 = arith.constant 0 : index
    %47 = vector.load %arg4[%c0_13, %c0_14] : memref<4x1xf32, #tpu.memory_space<vmem>>, vector<4x1xf32>
    %48 = vector.broadcast %47 : vector<4x1xf32> to vector<4x16xf32>
    %49 = arith.addf %46, %48 : vector<4x16xf32>
    %c0_15 = arith.constant 0 : index
    %c0_16 = arith.constant 0 : index
    %c0_17 = arith.constant 0 : index
    %50 = vector.load %arg5[%c0_15, %c0_16, %c0_17] : memref<1x4x16xf32, #tpu.memory_space<vmem>>, vector<1x4x16xf32>
    %51 = vector.shape_cast %50 : vector<1x4x16xf32> to vector<4x16xf32>
    %52 = vector.shape_cast %49 : vector<4x16xf32> to vector<1x4x16xf32>
    tpu.vector_store %arg5[%c0_15, %c0_16, %c0_17], %52 {strides = array<i32>} : memref<1x4x16xf32, #tpu.memory_space<vmem>>, vector<1x4x16xf32>,
    return
  }
  func.func @transform_0(%arg0: i32, %arg1: i32) -> (i32, i32, i32) {
    %c0_i32 = arith.constant 0 : i32
    %c0_i32_0 = arith.constant 0 : i32
    %c0_i32_1 = arith.constant 0 : i32
    return %arg0, %c0_i32, %c0_i32_0 : i32, i32, i32
  }
  func.func @transform_1(%arg0: i32, %arg1: i32) -> (i32, i32, i32) {
    %c0_i32 = arith.constant 0 : i32
    %c0_i32_0 = arith.constant 0 : i32
    %c0_i32_1 = arith.constant 0 : i32
    %c0_i32_2 = arith.constant 0 : i32
    return %c0_i32, %c0_i32_0, %c0_i32_1 : i32, i32, i32
  }
  func.func @transform_2(%arg0: i32, %arg1: i32) -> (i32, i32) {
    %c0_i32 = arith.constant 0 : i32
    %c0_i32_0 = arith.constant 0 : i32
    %c0_i32_1 = arith.constant 0 : i32
    return %c0_i32, %c0_i32_0 : i32, i32
  }
  func.func @transform_3(%arg0: i32, %arg1: i32) -> (i32, i32, i32) {
    %c0_i32 = arith.constant 0 : i32
    %c0_i32_0 = arith.constant 0 : i32
    return %arg0, %c0_i32, %arg1 : i32, i32, i32
  }
}

</mosaic_0001>

<llo_original>
// kernel: tpu_custom_call.1
$region0: #{tpu_custom_call.1}
  #allocation0 [shape = 'u32[]', space=smem, size = 0x4, offset = 0x4, fixed_abs, tag = 'smem constant byte address 0x4 - core index']
  #allocation1 [shape = 'u32[144,128]{1,0:T(1,128)}', space=vmem, size = 0x12000, scoped, tag = 'internal scratch']
  %s0 = inlined_call_operand.vmem [shape: f32[2,4,24], index: 0, kind: input, shape index: {}]
  %s1 = inlined_call_operand.vmem [shape: f32[9,4,4], index: 1, kind: input, shape index: {}]
  %s2 = inlined_call_operand.vmem [shape: f32[4,1], index: 2, kind: input, shape index: {}]
  %s3 = inlined_call_operand.hbm [shape: f32[2,4,16], index: 3, kind: output, shape index: {}]
  %s4 = sld [smem:[#allocation0]]
  $region45: #{tpu_custom_call.1} parent=0
    _
  %s6 = ssub.s32 1, %s4
  %s7 = scalar_select 0, %s6, %s4
  $region1: #{tpu_custom_call.1} parent=0
    #allocation2 [shape = 'u8[4096]{0}', space=vmem, size = 0x1000, scoped, tag = 'output window, operand 0']
    #allocation3 [shape = 's32[2]{0}', space=sflag, size = 0x8, scoped, tag = 'scoped memory for tpu_custom_call.1']
    %8 = vsyncpa [#allocation3], 0
    %s9 = scalar_lea.sflag [#allocation3], 1
    %10 = vsyncpa %s9, 0
    loop: start=0, step=1, limit=4
    $region2: #{tpu_custom_call.1} parent=1 // loop_pre_header
      _
    $region3: #{tpu_custom_call.1} parent=1 // loop_header
      %s12 = sphi 0, %s16
      %p13 = scmp.ge.s32.totalorder %s12, 4
      %s19 = sphi 0, %s31
      %s20 = sphi 0, %s27
      %s21 = sphi 0, %s19
      %s22 = sphi 0, %s20
      %s23 = sphi 0, %s21
      %s24 = sphi 0, %s22
      %s34 = sphi 0, %s36
      %s37 = sphi 0, %s34
      %s38 = sphi 0, %s37
      %s54 = sphi 0, %s38
      %s58 = sphi 0, %s58
      %s60 = sphi 0, %s58
      %s61 = sphi 0, %s60
      %s75 = sphi 0, %s61
      %s79 = sphi 0, %s79
      %s81 = sphi 0, %s79
      %s82 = sphi 0, %s81
      %s96 = sphi 0, %s82
      %s104 = sphi 0, %s106
      %s107 = sphi 0, %s104
      %s108 = sphi 0, %s107
      %s124 = sphi 0, %s108
    $region4: #{tpu_custom_call.1} parent=1 // loop_header_branch
      %15 = sbr.rel (%p13) target = $region8
    $region5: #{tpu_custom_call.1} parent=1 // loop_body
      %s17 = ssub.s32 %s12, 1
      %s18 = ssub.s32 %s12, 2
      %s25 = sadd.s32 1, %s20
      %p26 = scmp.ge.s32.totalorder %s25, 1
      %s27 = scalar_select %p26, 0, %s25
      %s28 = sadd.s32 1, %s19
      %s29 = scalar_select %p26, %s28, %s19
      %p30 = scmp.ge.s32.totalorder %s29, 2
      %s31 = scalar_select %p30, 0, %s29
      %s32 = ssub.s32 %s19, %s31
      %p33 = scmp.eq.s32.totalorder %s32, 0
      %s35 = sadd.s32 %s34, 1
      %s36 = scalar_select %p33, %s34, %s35
      %p39 = pneg %p33
      %p40 = scmp.eq.s32.totalorder %s12, 1
      %p41 = por %p39, %p40
      %p42 = scmp.ne.s32.totalorder %s34, %s37
      %p43 = scmp.eq.s32.totalorder %s12, 0
      %p44 = por %p42, %p43
      %p45 = scmp.ne.s32.totalorder %s34, %s37
      %p46 = scmp.eq.s32.totalorder %s17, 1
      %p47 = por %p45, %p46
      %p48 = scmp.ne.s32.totalorder %s37, %s38
      %p49 = scmp.eq.s32.totalorder %s17, 0
      %p50 = por %p48, %p49
      %p51 = scmp.ne.s32.totalorder %s37, %s38
      %p52 = scmp.eq.s32.totalorder %s18, 1
      %p53 = por %p51, %p52
      %p55 = scmp.ne.s32.totalorder %s38, %s54
      %p56 = scmp.eq.s32.totalorder %s18, 0
      %p57 = por %p55, %p56
      %s59 = sadd.s32 %s58, 1
      %p62 = scmp.eq.s32.totalorder %s12, 1
      %p63 = scmp.ne.s32.totalorder %s58, %s60
      %p64 = scmp.eq.s32.totalorder %s12, 0
      %p65 = por %p63, %p64
      %p66 = scmp.ne.s32.totalorder %s58, %s60
      %p67 = scmp.eq.s32.totalorder %s17, 1
      %p68 = por %p66, %p67
      %p69 = scmp.ne.s32.totalorder %s60, %s61
      %p70 = scmp.eq.s32.totalorder %s17, 0
      %p71 = por %p69, %p70
      %p72 = scmp.ne.s32.totalorder %s60, %s61
      %p73 = scmp.eq.s32.totalorder %s18, 1
      %p74 = por %p72, %p73
      %p76 = scmp.ne.s32.totalorder %s61, %s75
      %p77 = scmp.eq.s32.totalorder %s18, 0
      %p78 = por %p76, %p77
      %s80 = sadd.s32 %s79, 1
      %p83 = scmp.eq.s32.totalorder %s12, 1
      %p84 = scmp.ne.s32.totalorder %s79, %s81
      %p85 = scmp.eq.s32.totalorder %s12, 0
      %p86 = por %p84, %p85
      %p87 = scmp.ne.s32.totalorder %s79, %s81
      %p88 = scmp.eq.s32.totalorder %s17, 1
      %p89 = por %p87, %p88
      %p90 = scmp.ne.s32.totalorder %s81, %s82
      %p91 = scmp.eq.s32.totalorder %s17, 0
      %p92 = por %p90, %p91
      %p93 = scmp.ne.s32.totalorder %s81, %s82
      %p94 = scmp.eq.s32.totalorder %s18, 1
      %p95 = por %p93, %p94
      %p97 = scmp.ne.s32.totalorder %s82, %s96
      %p98 = scmp.eq.s32.totalorder %s18, 0
      %p99 = por %p97, %p98
      %s100 = ssub.s32 %s19, %s31
      %s101 = ssub.s32 %s20, %s27
      %s102 = sor.u32 %s100, %s101
      %p103 = scmp.eq.s32.totalorder %s102, 0
      %s105 = sadd.s32 %s104, 1
      %s106 = scalar_select %p103, %s104, %s105
      %p109 = pneg %p103
      %p110 = scmp.eq.s32.totalorder %s12, 1
      %p111 = por %p109, %p110
      %p112 = scmp.ne.s32.totalorder %s104, %s107
      %p113 = scmp.eq.s32.totalorder %s12, 0
      %p114 = por %p112, %p113
      %p115 = scmp.ne.s32.totalorder %s104, %s107
      %p116 = scmp.eq.s32.totalorder %s17, 1
      %p117 = por %p115, %p116
      %p118 = scmp.ne.s32.totalorder %s107, %s108
      %p119 = scmp.eq.s32.totalorder %s17, 0
      %p120 = por %p118, %p119
      %p121 = scmp.ne.s32.totalorder %s107, %s108
      %p122 = scmp.eq.s32.totalorder %s18, 1
      %p123 = por %p121, %p122
      %p125 = scmp.ne.s32.totalorder %s108, %s124
      %p126 = scmp.eq.s32.totalorder %s18, 0
      %p127 = por %p125, %p126
      %p128 = scmp.le.s32.totalorder 1, %s12
      %p129 = scmp.lt.s32.totalorder %s12, 3
      %p130 = pnand %p128, %p129
      %p131 = pneg %p130
      // Predicated region
      $region9: #{tpu_custom_call.1} parent=5 // pred_check
        _
      $region10: #{tpu_custom_call.1} parent=5 // pred_check_branch
        %133 = sbr.rel (%p130) target = $region12
      $region11: #{tpu_custom_call.1} parent=5 // pred_region
        %s134 = ssub.s32 %s12, 1
        // Predicated region
        $region13: #{tpu_custom_call.1} parent=11 // pred_check
          %p135 = pneg %p71
        $region14: #{tpu_custom_call.1} parent=11 // pred_check_branch
          %137 = sbr.rel (%p135) target = $region16
        $region15: #{tpu_custom_call.1} parent=11 // pred_region
          _
        $region16: #{tpu_custom_call.1} parent=11 // pred_fallthru
          _
        // Predicated region
        $region17: #{tpu_custom_call.1} parent=11 // pred_check
          %p138 = pneg %p92
        $region18: #{tpu_custom_call.1} parent=11 // pred_check_branch
          %140 = sbr.rel (%p138) target = $region20
        $region19: #{tpu_custom_call.1} parent=11 // pred_region
          _
        $region20: #{tpu_custom_call.1} parent=11 // pred_fallthru
          _
      $region12: #{tpu_custom_call.1} parent=5 // pred_fallthru
        _
      %p141 = scmp.lt.s32.totalorder %s12, 2
      // Predicated region
      $region21: #{tpu_custom_call.1} parent=5 // pred_check
        %p142 = pneg %p141
      $region22: #{tpu_custom_call.1} parent=5 // pred_check_branch
        %144 = sbr.rel (%p142) target = $region24
      $region23: #{tpu_custom_call.1} parent=5 // pred_region
        // Predicated region
        $region25: #{tpu_custom_call.1} parent=23 // pred_check
          %p145 = pneg %p44
        $region26: #{tpu_custom_call.1} parent=23 // pred_check_branch
          %147 = sbr.rel (%p145) target = $region28
        $region27: #{tpu_custom_call.1} parent=23 // pred_region
          %p148 = scmp.lt.s32.totalorder %s19, 1
          %s149 = scalar_select %p148, %s19, 1
          %s150 = smul.addr %s149, 4
          %s151 = scalar_lea.vmem %s0, %s150
        $region28: #{tpu_custom_call.1} parent=23 // pred_fallthru
          _
      $region24: #{tpu_custom_call.1} parent=5 // pred_fallthru
        _
      %p152 = scmp.le.s32.totalorder 1, %s12
      %p153 = scmp.lt.s32.totalorder %s12, 3
      %p154 = pnand %p152, %p153
      %p155 = pneg %p154
      // Predicated region
      $region29: #{tpu_custom_call.1} parent=5 // pred_check
        _
      $region30: #{tpu_custom_call.1} parent=5 // pred_check_branch
        %157 = sbr.rel (%p154) target = $region32
      $region31: #{tpu_custom_call.1} parent=5 // pred_region
        %s158 = ssub.s32 %s12, 1
        %p159 = scmp.lt.s32.totalorder %s21, 1
        %s160 = scalar_select %p159, %s21, 1
        %s161 = smul.addr %s160, 4
        %s162 = scalar_lea.vmem %s0, %s161
        %p163 = pneg %p50
        %p164 = pneg %p47
        %p165 = pneg %p71
        %p166 = pneg %p68
        %p167 = pneg %p92
        %p168 = pneg %p89
        %p169 = pneg %p120
        %p170 = pneg %p117
        %s171 = sand.u32 %s107, 1
        %s172 = scalar_lea.sflag [#allocation3], %s171
        %s173 = sand.u32 %s107, 1
        %s174 = smul.addr %s173, 4
        %s175 = scalar_lea.vmem [#allocation2], %s174
        %p176 = scmp.lt.s32.totalorder %s21, 1
        %s177 = scalar_select %p176, %s21, 1
        %s178 = smul.addr %s177, 4
        %s179 = scalar_lea.vmem %s0, %s178
        %v180 = vld [vmem:[%s179] sm:$0xf]
        %v181 = vld [vmem:[%s1] sm:$0xf]
        %v182 = vld [vmem:[%s1 + $0x4] sm:$0xf]
        %v183 = vld [vmem:[%s1 + $0x8] sm:$0xf]
        %v184 = vld [vmem:[%s1 + $0xc] sm:$0xf]
        %v185 = vld [vmem:[%s1 + $0x10] sm:$0xf]
        %v186 = vld [vmem:[%s1 + $0x14] sm:$0xf]
        %v187 = vld [vmem:[%s1 + $0x18] sm:$0xf]
        %v188 = vld [vmem:[%s1 + $0x1c] sm:$0xf]
        %v189 = vld [vmem:[%s1 + $0x20] sm:$0xf]
        %191 = vrot.lane.b32.xlu0 %v180, 127
        %v192 = vpop.permute.xlu0 %191
        %vm193 = vcmask 31744
        %v195 = vsel %vm193, %v182, 0
        %vm197 = vcmask 1043456
        %v198 = vsel %vm197, %v192, 0
        %200 = vmatprep.subr.mxu0 0.0
        %201 = vmatpush1.msra.mxu0 0.0
        %202 = vmatprep.subr.mxu0 0.0
        %203 = vmatpush1.msra.mxu0 0.0
        %204 = vmatprep.subr.mxu0 0.0
        %205 = vmatpush1.msra.mxu0 0.0
        %206 = vmatprep.subr.mxu0 0.0
        %207 = vmatpush1.msra.mxu0 0.0
        %208 = vmatprep.subr.mxu0 0.0
        %209 = vmatpush1.msra.mxu0 0.0
        %210 = vmatprep.subr.mxu0 0.0
        %211 = vmatpush1.msra.mxu0 0.0
        %212 = vmatprep.subr.mxu0 0.0
        %213 = vmatpush1.msra.mxu0 0.0
        %214 = vmatprep.subr.mxu0 0.0
        %215 = vmatpush1.msra.mxu0 0.0
        %216 = vmatprep.subr.mxu0 0.0
        %217 = vmatpush1.msra.mxu0 0.0
        %218 = vmatprep.subr.mxu0 0.0
        %219 = vmatpush1.msra.mxu0 0.0
        %220 = vmatprep.subr.mxu0 0.0
        %221 = vmatpush1.msra.mxu0 0.0
        %222 = vmatprep.subr.mxu0 0.0
        %223 = vmatpush1.msra.mxu0 0.0
        %224 = vmatprep.subr.mxu0 0.0
        %225 = vmatpush1.msra.mxu0 0.0
        %226 = vmatprep.subr.mxu0 0.0
        %227 = vmatpush1.msra.mxu0 0.0
        %228 = vmatprep.subr.mxu0 0.0
        %229 = vmatpush1.msra.mxu0 0.0
        %230 = vmatprep.subr.mxu0 0.0
        %231 = vmatpush1.msra.mxu0 %v198
        %232 = vmatprep.subr.mxu0 0.0
        %233 = vmatpush2.msra.mxu0 0.0
        %234 = vmatprep.subr.mxu0 0.0
        %235 = vmatpush2.msra.mxu0 0.0
        %236 = vmatprep.subr.mxu0 0.0
        %237 = vmatpush2.msra.mxu0 0.0
        %238 = vmatprep.subr.mxu0 0.0
        %239 = vmatpush2.msra.mxu0 0.0
        %240 = vmatprep.subr.mxu0 0.0
        %241 = vmatpush2.msra.mxu0 0.0
        %242 = vmatprep.subr.mxu0 0.0
        %243 = vmatpush2.msra.mxu0 0.0
        %244 = vmatprep.subr.mxu0 0.0
        %245 = vmatpush2.msra.mxu0 0.0
        %246 = vmatprep.subr.mxu0 0.0
        %247 = vmatpush2.msra.mxu0 0.0
        %248 = vmatprep.subr.mxu0 0.0
        %249 = vmatpush2.msra.mxu0 0.0
        %250 = vmatprep.subr.mxu0 0.0
        %251 = vmatpush2.msra.mxu0 0.0
        %252 = vmatprep.subr.mxu0 0.0
        %253 = vmatpush2.msra.mxu0 0.0
        %254 = vmatprep.subr.mxu0 0.0
        %255 = vmatpush2.msra.mxu0 0.0
        %256 = vmatprep.subr.mxu0 0.0
        %257 = vmatpush2.msra.mxu0 0.0
        %258 = vmatprep.subr.mxu0 0.0
        %259 = vmatpush2.msra.mxu0 0.0
        %260 = vmatprep.subr.mxu0 0.0
        %261 = vmatpush2.msra.mxu0 0.0
        %262 = vmatprep.subr.mxu0 0.0
        %263 = vmatpush2.msra.mxu0 0.0
        %264 = vmatprep.mubr.f32.mxu0 0.0
        %265 = vmatmul.mubr.f32.gmra.mxu0 %v195
        %v266 = vpop.f32.mrf.mxu0
        %v267 = vadd.f32 0.0, %v266
        %v268 = vpop.f32.mrf.mxu0
        %269 = vdwg.mxu0
        %v271 = vsel %vm193, %v181, 0
        %v273 = vsel %vm197, %v180, 0
        %275 = vmatprep.subr.mxu0 0.0
        %276 = vmatpush1.msra.mxu0 0.0
        %277 = vmatprep.subr.mxu0 0.0
        %278 = vmatpush1.msra.mxu0 0.0
        %279 = vmatprep.subr.mxu0 0.0
        %280 = vmatpush1.msra.mxu0 0.0
        %281 = vmatprep.subr.mxu0 0.0
        %282 = vmatpush1.msra.mxu0 0.0
        %283 = vmatprep.subr.mxu0 0.0
        %284 = vmatpush1.msra.mxu0 0.0
        %285 = vmatprep.subr.mxu0 0.0
        %286 = vmatpush1.msra.mxu0 0.0
        %287 = vmatprep.subr.mxu0 0.0
        %288 = vmatpush1.msra.mxu0 0.0
        %289 = vmatprep.subr.mxu0 0.0
        %290 = vmatpush1.msra.mxu0 0.0
        %291 = vmatprep.subr.mxu0 0.0
        %292 = vmatpush1.msra.mxu0 0.0
        %293 = vmatprep.subr.mxu0 0.0
        %294 = vmatpush1.msra.mxu0 0.0
        %295 = vmatprep.subr.mxu0 0.0
        %296 = vmatpush1.msra.mxu0 0.0
        %297 = vmatprep.subr.mxu0 0.0
        %298 = vmatpush1.msra.mxu0 0.0
        %299 = vmatprep.subr.mxu0 0.0
        %300 = vmatpush1.msra.mxu0 0.0
        %301 = vmatprep.subr.mxu0 0.0
        %302 = vmatpush1.msra.mxu0 0.0
        %303 = vmatprep.subr.mxu0 0.0
        %304 = vmatpush1.msra.mxu0 0.0
        %305 = vmatprep.subr.mxu0 0.0
        %306 = vmatpush1.msra.mxu0 %v273
        %307 = vmatprep.subr.mxu0 0.0
        %308 = vmatpush2.msra.mxu0 0.0
        %309 = vmatprep.subr.mxu0 0.0
        %310 = vmatpush2.msra.mxu0 0.0
        %311 = vmatprep.subr.mxu0 0.0
        %312 = vmatpush2.msra.mxu0 0.0
        %313 = vmatprep.subr.mxu0 0.0
        %314 = vmatpush2.msra.mxu0 0.0
        %315 = vmatprep.subr.mxu0 0.0
        %316 = vmatpush2.msra.mxu0 0.0
        %317 = vmatprep.subr.mxu0 0.0
        %318 = vmatpush2.msra.mxu0 0.0
        %319 = vmatprep.subr.mxu0 0.0
        %320 = vmatpush2.msra.mxu0 0.0
        %321 = vmatprep.subr.mxu0 0.0
        %322 = vmatpush2.msra.mxu0 0.0
        %323 = vmatprep.subr.mxu0 0.0
        %324 = vmatpush2.msra.mxu0 0.0
        %325 = vmatprep.subr.mxu0 0.0
        %326 = vmatpush2.msra.mxu0 0.0
        %327 = vmatprep.subr.mxu0 0.0
        %328 = vmatpush2.msra.mxu0 0.0
        %329 = vmatprep.subr.mxu0 0.0
        %330 = vmatpush2.msra.mxu0 0.0
        %331 = vmatprep.subr.mxu0 0.0
        %332 = vmatpush2.msra.mxu0 0.0
        %333 = vmatprep.subr.mxu0 0.0
        %334 = vmatpush2.msra.mxu0 0.0
        %335 = vmatprep.subr.mxu0 0.0
        %336 = vmatpush2.msra.mxu0 0.0
        %337 = vmatprep.subr.mxu0 0.0
        %338 = vmatpush2.msra.mxu0 0.0
        %339 = vmatprep.mubr.f32.mxu0 0.0
        %340 = vmatmul.mubr.f32.gmra.mxu0 %v271
        %v341 = vpop.f32.mrf.mxu0
        %v342 = vadd.f32 %v267, %v341
        %v343 = vpop.f32.mrf.mxu0
        %344 = vdwg.mxu0
        %345 = vrot.lane.b32.xlu0 %v180, 126
        %v346 = vpop.permute.xlu0 %345
        %v348 = vsel %vm193, %v183, 0
        %v350 = vsel %vm197, %v346, 0
        %352 = vmatprep.subr.mxu0 0.0
        %353 = vmatpush1.msra.mxu0 0.0
        %354 = vmatprep.subr.mxu0 0.0
        %355 = vmatpush1.msra.mxu0 0.0
        %356 = vmatprep.subr.mxu0 0.0
        %357 = vmatpush1.msra.mxu0 0.0
        %358 = vmatprep.subr.mxu0 0.0
        %359 = vmatpush1.msra.mxu0 0.0
        %360 = vmatprep.subr.mxu0 0.0
        %361 = vmatpush1.msra.mxu0 0.0
        %362 = vmatprep.subr.mxu0 0.0
        %363 = vmatpush1.msra.mxu0 0.0
        %364 = vmatprep.subr.mxu0 0.0
        %365 = vmatpush1.msra.mxu0 0.0
        %366 = vmatprep.subr.mxu0 0.0
        %367 = vmatpush1.msra.mxu0 0.0
        %368 = vmatprep.subr.mxu0 0.0
        %369 = vmatpush1.msra.mxu0 0.0
        %370 = vmatprep.subr.mxu0 0.0
        %371 = vmatpush1.msra.mxu0 0.0
        %372 = vmatprep.subr.mxu0 0.0
        %373 = vmatpush1.msra.mxu0 0.0
        %374 = vmatprep.subr.mxu0 0.0
        %375 = vmatpush1.msra.mxu0 0.0
        %376 = vmatprep.subr.mxu0 0.0
        %377 = vmatpush1.msra.mxu0 0.0
        %378 = vmatprep.subr.mxu0 0.0
        %379 = vmatpush1.msra.mxu0 0.0
        %380 = vmatprep.subr.mxu0 0.0
        %381 = vmatpush1.msra.mxu0 0.0
        %382 = vmatprep.subr.mxu0 0.0
        %383 = vmatpush1.msra.mxu0 %v350
        %384 = vmatprep.subr.mxu0 0.0
        %385 = vmatpush2.msra.mxu0 0.0
        %386 = vmatprep.subr.mxu0 0.0
        %387 = vmatpush2.msra.mxu0 0.0
        %388 = vmatprep.subr.mxu0 0.0
        %389 = vmatpush2.msra.mxu0 0.0
        %390 = vmatprep.subr.mxu0 0.0
        %391 = vmatpush2.msra.mxu0 0.0
        %392 = vmatprep.subr.mxu0 0.0
        %393 = vmatpush2.msra.mxu0 0.0
        %394 = vmatprep.subr.mxu0 0.0
        %395 = vmatpush2.msra.mxu0 0.0
        %396 = vmatprep.subr.mxu0 0.0
        %397 = vmatpush2.msra.mxu0 0.0
        %398 = vmatprep.subr.mxu0 0.0
        %399 = vmatpush2.msra.mxu0 0.0
        %400 = vmatprep.subr.mxu0 0.0
        %401 = vmatpush2.msra.mxu0 0.0
        %402 = vmatprep.subr.mxu0 0.0
        %403 = vmatpush2.msra.mxu0 0.0
        %404 = vmatprep.subr.mxu0 0.0
        %405 = vmatpush2.msra.mxu0 0.0
        %406 = vmatprep.subr.mxu0 0.0
        %407 = vmatpush2.msra.mxu0 0.0
        %408 = vmatprep.subr.mxu0 0.0
        %409 = vmatpush2.msra.mxu0 0.0
        %410 = vmatprep.subr.mxu0 0.0
        %411 = vmatpush2.msra.mxu0 0.0
        %412 = vmatprep.subr.mxu0 0.0
        %413 = vmatpush2.msra.mxu0 0.0
        %414 = vmatprep.subr.mxu0 0.0
        %415 = vmatpush2.msra.mxu0 0.0
        %416 = vmatprep.mubr.f32.mxu0 0.0
        %417 = vmatmul.mubr.f32.gmra.mxu0 %v348
        %v418 = vpop.f32.mrf.mxu0
        %v419 = vadd.f32 0.0, %v418
        %v420 = vpop.f32.mrf.mxu0
        %421 = vdwg.mxu0
        %v422 = vadd.f32 %v342, %v419
        %423 = vrot.lane.b32.xlu0 %v180, 125
        %v424 = vpop.permute.xlu0 %423
        %v426 = vsel %vm193, %v184, 0
        %v428 = vsel %vm197, %v424, 0
        %430 = vmatprep.subr.mxu0 0.0
        %431 = vmatpush1.msra.mxu0 0.0
        %432 = vmatprep.subr.mxu0 0.0
        %433 = vmatpush1.msra.mxu0 0.0
        %434 = vmatprep.subr.mxu0 0.0
        %435 = vmatpush1.msra.mxu0 0.0
        %436 = vmatprep.subr.mxu0 0.0
        %437 = vmatpush1.msra.mxu0 0.0
        %438 = vmatprep.subr.mxu0 0.0
        %439 = vmatpush1.msra.mxu0 0.0
        %440 = vmatprep.subr.mxu0 0.0
        %441 = vmatpush1.msra.mxu0 0.0
        %442 = vmatprep.subr.mxu0 0.0
        %443 = vmatpush1.msra.mxu0 0.0
        %444 = vmatprep.subr.mxu0 0.0
        %445 = vmatpush1.msra.mxu0 0.0
        %446 = vmatprep.subr.mxu0 0.0
        %447 = vmatpush1.msra.mxu0 0.0
        %448 = vmatprep.subr.mxu0 0.0
        %449 = vmatpush1.msra.mxu0 0.0
        %450 = vmatprep.subr.mxu0 0.0
        %451 = vmatpush1.msra.mxu0 0.0
        %452 = vmatprep.subr.mxu0 0.0
        %453 = vmatpush1.msra.mxu0 0.0
        %454 = vmatprep.subr.mxu0 0.0
        %455 = vmatpush1.msra.mxu0 0.0
        %456 = vmatprep.subr.mxu0 0.0
        %457 = vmatpush1.msra.mxu0 0.0
        %458 = vmatprep.subr.mxu0 0.0
        %459 = vmatpush1.msra.mxu0 0.0
        %460 = vmatprep.subr.mxu0 0.0
        %461 = vmatpush1.msra.mxu0 %v428
        %462 = vmatprep.subr.mxu0 0.0
        %463 = vmatpush2.msra.mxu0 0.0
        %464 = vmatprep.subr.mxu0 0.0
        %465 = vmatpush2.msra.mxu0 0.0
        %466 = vmatprep.subr.mxu0 0.0
        %467 = vmatpush2.msra.mxu0 0.0
        %468 = vmatprep.subr.mxu0 0.0
        %469 = vmatpush2.msra.mxu0 0.0
        %470 = vmatprep.subr.mxu0 0.0
        %471 = vmatpush2.msra.mxu0 0.0
        %472 = vmatprep.subr.mxu0 0.0
        %473 = vmatpush2.msra.mxu0 0.0
        %474 = vmatprep.subr.mxu0 0.0
        %475 = vmatpush2.msra.mxu0 0.0
        %476 = vmatprep.subr.mxu0 0.0
        %477 = vmatpush2.msra.mxu0 0.0
        %478 = vmatprep.subr.mxu0 0.0
        %479 = vmatpush2.msra.mxu0 0.0
        %480 = vmatprep.subr.mxu0 0.0
        %481 = vmatpush2.msra.mxu0 0.0
        %482 = vmatprep.subr.mxu0 0.0
        %483 = vmatpush2.msra.mxu0 0.0
        %484 = vmatprep.subr.mxu0 0.0
        %485 = vmatpush2.msra.mxu0 0.0
        %486 = vmatprep.subr.mxu0 0.0
        %487 = vmatpush2.msra.mxu0 0.0
        %488 = vmatprep.subr.mxu0 0.0
        %489 = vmatpush2.msra.mxu0 0.0
        %490 = vmatprep.subr.mxu0 0.0
        %491 = vmatpush2.msra.mxu0 0.0
        %492 = vmatprep.subr.mxu0 0.0
        %493 = vmatpush2.msra.mxu0 0.0
        %494 = vmatprep.mubr.f32.mxu0 0.0
        %495 = vmatmul.mubr.f32.gmra.mxu0 %v426
        %v496 = vpop.f32.mrf.mxu0
        %v497 = vadd.f32 0.0, %v496
        %v498 = vpop.f32.mrf.mxu0
        %499 = vdwg.mxu0
        %v500 = vadd.f32 %v422, %v497
        %501 = vrot.lane.b32.xlu0 %v180, 124
        %v502 = vpop.permute.xlu0 %501
        %v504 = vsel %vm193, %v185, 0
        %v506 = vsel %vm197, %v502, 0
        %508 = vmatprep.subr.mxu0 0.0
        %509 = vmatpush1.msra.mxu0 0.0
        %510 = vmatprep.subr.mxu0 0.0
        %511 = vmatpush1.msra.mxu0 0.0
        %512 = vmatprep.subr.mxu0 0.0
        %513 = vmatpush1.msra.mxu0 0.0
        %514 = vmatprep.subr.mxu0 0.0
        %515 = vmatpush1.msra.mxu0 0.0
        %516 = vmatprep.subr.mxu0 0.0
        %517 = vmatpush1.msra.mxu0 0.0
        %518 = vmatprep.subr.mxu0 0.0
        %519 = vmatpush1.msra.mxu0 0.0
        %520 = vmatprep.subr.mxu0 0.0
        %521 = vmatpush1.msra.mxu0 0.0
        %522 = vmatprep.subr.mxu0 0.0
        %523 = vmatpush1.msra.mxu0 0.0
        %524 = vmatprep.subr.mxu0 0.0
        %525 = vmatpush1.msra.mxu0 0.0
        %526 = vmatprep.subr.mxu0 0.0
        %527 = vmatpush1.msra.mxu0 0.0
        %528 = vmatprep.subr.mxu0 0.0
        %529 = vmatpush1.msra.mxu0 0.0
        %530 = vmatprep.subr.mxu0 0.0
        %531 = vmatpush1.msra.mxu0 0.0
        %532 = vmatprep.subr.mxu0 0.0
        %533 = vmatpush1.msra.mxu0 0.0
        %534 = vmatprep.subr.mxu0 0.0
        %535 = vmatpush1.msra.mxu0 0.0
        %536 = vmatprep.subr.mxu0 0.0
        %537 = vmatpush1.msra.mxu0 0.0
        %538 = vmatprep.subr.mxu0 0.0
        %539 = vmatpush1.msra.mxu0 %v506
        %540 = vmatprep.subr.mxu0 0.0
        %541 = vmatpush2.msra.mxu0 0.0
        %542 = vmatprep.subr.mxu0 0.0
        %543 = vmatpush2.msra.mxu0 0.0
        %544 = vmatprep.subr.mxu0 0.0
        %545 = vmatpush2.msra.mxu0 0.0
        %546 = vmatprep.subr.mxu0 0.0
        %547 = vmatpush2.msra.mxu0 0.0
        %548 = vmatprep.subr.mxu0 0.0
        %549 = vmatpush2.msra.mxu0 0.0
        %550 = vmatprep.subr.mxu0 0.0
        %551 = vmatpush2.msra.mxu0 0.0
        %552 = vmatprep.subr.mxu0 0.0
        %553 = vmatpush2.msra.mxu0 0.0
        %554 = vmatprep.subr.mxu0 0.0
        %555 = vmatpush2.msra.mxu0 0.0
        %556 = vmatprep.subr.mxu0 0.0
        %557 = vmatpush2.msra.mxu0 0.0
        %558 = vmatprep.subr.mxu0 0.0
        %559 = vmatpush2.msra.mxu0 0.0
        %560 = vmatprep.subr.mxu0 0.0
        %561 = vmatpush2.msra.mxu0 0.0
        %562 = vmatprep.subr.mxu0 0.0
        %563 = vmatpush2.msra.mxu0 0.0
        %564 = vmatprep.subr.mxu0 0.0
        %565 = vmatpush2.msra.mxu0 0.0
        %566 = vmatprep.subr.mxu0 0.0
        %567 = vmatpush2.msra.mxu0 0.0
        %568 = vmatprep.subr.mxu0 0.0
        %569 = vmatpush2.msra.mxu0 0.0
        %570 = vmatprep.subr.mxu0 0.0
        %571 = vmatpush2.msra.mxu0 0.0
        %572 = vmatprep.mubr.f32.mxu0 0.0
        %573 = vmatmul.mubr.f32.gmra.mxu0 %v504
        %v574 = vpop.f32.mrf.mxu0
        %v575 = vadd.f32 0.0, %v574
        %v576 = vpop.f32.mrf.mxu0
        %577 = vdwg.mxu0
        %v578 = vadd.f32 %v500, %v575
        %579 = vrot.lane.b32.xlu0 %v180, 123
        %v580 = vpop.permute.xlu0 %579
        %v582 = vsel %vm193, %v186, 0
        %v584 = vsel %vm197, %v580, 0
        %586 = vmatprep.subr.mxu0 0.0
        %587 = vmatpush1.msra.mxu0 0.0
        %588 = vmatprep.subr.mxu0 0.0
        %589 = vmatpush1.msra.mxu0 0.0
        %590 = vmatprep.subr.mxu0 0.0
        %591 = vmatpush1.msra.mxu0 0.0
        %592 = vmatprep.subr.mxu0 0.0
        %593 = vmatpush1.msra.mxu0 0.0
        %594 = vmatprep.subr.mxu0 0.0
        %595 = vmatpush1.msra.mxu0 0.0
        %596 = vmatprep.subr.mxu0 0.0
        %597 = vmatpush1.msra.mxu0 0.0
        %598 = vmatprep.subr.mxu0 0.0
        %599 = vmatpush1.msra.mxu0 0.0
        %600 = vmatprep.subr.mxu0 0.0
        %601 = vmatpush1.msra.mxu0 0.0
        %602 = vmatprep.subr.mxu0 0.0
        %603 = vmatpush1.msra.mxu0 0.0
        %604 = vmatprep.subr.mxu0 0.0
        %605 = vmatpush1.msra.mxu0 0.0
        %606 = vmatprep.subr.mxu0 0.0
        %607 = vmatpush1.msra.mxu0 0.0
        %608 = vmatprep.subr.mxu0 0.0
        %609 = vmatpush1.msra.mxu0 0.0
        %610 = vmatprep.subr.mxu0 0.0
        %611 = vmatpush1.msra.mxu0 0.0
        %612 = vmatprep.subr.mxu0 0.0
        %613 = vmatpush1.msra.mxu0 0.0
        %614 = vmatprep.subr.mxu0 0.0
        %615 = vmatpush1.msra.mxu0 0.0
        %616 = vmatprep.subr.mxu0 0.0
        %617 = vmatpush1.msra.mxu0 %v584
        %618 = vmatprep.subr.mxu0 0.0
        %619 = vmatpush2.msra.mxu0 0.0
        %620 = vmatprep.subr.mxu0 0.0
        %621 = vmatpush2.msra.mxu0 0.0
        %622 = vmatprep.subr.mxu0 0.0
        %623 = vmatpush2.msra.mxu0 0.0
        %624 = vmatprep.subr.mxu0 0.0
        %625 = vmatpush2.msra.mxu0 0.0
        %626 = vmatprep.subr.mxu0 0.0
        %627 = vmatpush2.msra.mxu0 0.0
        %628 = vmatprep.subr.mxu0 0.0
        %629 = vmatpush2.msra.mxu0 0.0
        %630 = vmatprep.subr.mxu0 0.0
        %631 = vmatpush2.msra.mxu0 0.0
        %632 = vmatprep.subr.mxu0 0.0
        %633 = vmatpush2.msra.mxu0 0.0
        %634 = vmatprep.subr.mxu0 0.0
        %635 = vmatpush2.msra.mxu0 0.0
        %636 = vmatprep.subr.mxu0 0.0
        %637 = vmatpush2.msra.mxu0 0.0
        %638 = vmatprep.subr.mxu0 0.0
        %639 = vmatpush2.msra.mxu0 0.0
        %640 = vmatprep.subr.mxu0 0.0
        %641 = vmatpush2.msra.mxu0 0.0
        %642 = vmatprep.subr.mxu0 0.0
        %643 = vmatpush2.msra.mxu0 0.0
        %644 = vmatprep.subr.mxu0 0.0
        %645 = vmatpush2.msra.mxu0 0.0
        %646 = vmatprep.subr.mxu0 0.0
        %647 = vmatpush2.msra.mxu0 0.0
        %648 = vmatprep.subr.mxu0 0.0
        %649 = vmatpush2.msra.mxu0 0.0
        %650 = vmatprep.mubr.f32.mxu0 0.0
        %651 = vmatmul.mubr.f32.gmra.mxu0 %v582
        %v652 = vpop.f32.mrf.mxu0
        %v653 = vadd.f32 0.0, %v652
        %v654 = vpop.f32.mrf.mxu0
        %655 = vdwg.mxu0
        %v656 = vadd.f32 %v578, %v653
        %657 = vrot.lane.b32.xlu0 %v180, 122
        %v658 = vpop.permute.xlu0 %657
        %v660 = vsel %vm193, %v187, 0
        %v662 = vsel %vm197, %v658, 0
        %664 = vmatprep.subr.mxu0 0.0
        %665 = vmatpush1.msra.mxu0 0.0
        %666 = vmatprep.subr.mxu0 0.0
        %667 = vmatpush1.msra.mxu0 0.0
        %668 = vmatprep.subr.mxu0 0.0
        %669 = vmatpush1.msra.mxu0 0.0
        %670 = vmatprep.subr.mxu0 0.0
        %671 = vmatpush1.msra.mxu0 0.0
        %672 = vmatprep.subr.mxu0 0.0
        %673 = vmatpush1.msra.mxu0 0.0
        %674 = vmatprep.subr.mxu0 0.0
        %675 = vmatpush1.msra.mxu0 0.0
        %676 = vmatprep.subr.mxu0 0.0
        %677 = vmatpush1.msra.mxu0 0.0
        %678 = vmatprep.subr.mxu0 0.0
        %679 = vmatpush1.msra.mxu0 0.0
        %680 = vmatprep.subr.mxu0 0.0
        %681 = vmatpush1.msra.mxu0 0.0
        %682 = vmatprep.subr.mxu0 0.0
        %683 = vmatpush1.msra.mxu0 0.0
        %684 = vmatprep.subr.mxu0 0.0
        %685 = vmatpush1.msra.mxu0 0.0
        %686 = vmatprep.subr.mxu0 0.0
        %687 = vmatpush1.msra.mxu0 0.0
        %688 = vmatprep.subr.mxu0 0.0
        %689 = vmatpush1.msra.mxu0 0.0
        %690 = vmatprep.subr.mxu0 0.0
        %691 = vmatpush1.msra.mxu0 0.0
        %692 = vmatprep.subr.mxu0 0.0
        %693 = vmatpush1.msra.mxu0 0.0
        %694 = vmatprep.subr.mxu0 0.0
        %695 = vmatpush1.msra.mxu0 %v662
        %696 = vmatprep.subr.mxu0 0.0
        %697 = vmatpush2.msra.mxu0 0.0
        %698 = vmatprep.subr.mxu0 0.0
        %699 = vmatpush2.msra.mxu0 0.0
        %700 = vmatprep.subr.mxu0 0.0
        %701 = vmatpush2.msra.mxu0 0.0
        %702 = vmatprep.subr.mxu0 0.0
        %703 = vmatpush2.msra.mxu0 0.0
        %704 = vmatprep.subr.mxu0 0.0
        %705 = vmatpush2.msra.mxu0 0.0
        %706 = vmatprep.subr.mxu0 0.0
        %707 = vmatpush2.msra.mxu0 0.0
        %708 = vmatprep.subr.mxu0 0.0
        %709 = vmatpush2.msra.mxu0 0.0
        %710 = vmatprep.subr.mxu0 0.0
        %711 = vmatpush2.msra.mxu0 0.0
        %712 = vmatprep.subr.mxu0 0.0
        %713 = vmatpush2.msra.mxu0 0.0
        %714 = vmatprep.subr.mxu0 0.0
        %715 = vmatpush2.msra.mxu0 0.0
        %716 = vmatprep.subr.mxu0 0.0
        %717 = vmatpush2.msra.mxu0 0.0
        %718 = vmatprep.subr.mxu0 0.0
        %719 = vmatpush2.msra.mxu0 0.0
        %720 = vmatprep.subr.mxu0 0.0
        %721 = vmatpush2.msra.mxu0 0.0
        %722 = vmatprep.subr.mxu0 0.0
        %723 = vmatpush2.msra.mxu0 0.0
        %724 = vmatprep.subr.mxu0 0.0
        %725 = vmatpush2.msra.mxu0 0.0
        %726 = vmatprep.subr.mxu0 0.0
        %727 = vmatpush2.msra.mxu0 0.0
        %728 = vmatprep.mubr.f32.mxu0 0.0
        %729 = vmatmul.mubr.f32.gmra.mxu0 %v660
        %v730 = vpop.f32.mrf.mxu0
        %v731 = vadd.f32 0.0, %v730
        %v732 = vpop.f32.mrf.mxu0
        %733 = vdwg.mxu0
        %v734 = vadd.f32 %v656, %v731
        %735 = vrot.lane.b32.xlu0 %v180, 121
        %v736 = vpop.permute.xlu0 %735
        %v738 = vsel %vm193, %v188, 0
        %v740 = vsel %vm197, %v736, 0
        %742 = vmatprep.subr.mxu0 0.0
        %743 = vmatpush1.msra.mxu0 0.0
        %744 = vmatprep.subr.mxu0 0.0
        %745 = vmatpush1.msra.mxu0 0.0
        %746 = vmatprep.subr.mxu0 0.0
        %747 = vmatpush1.msra.mxu0 0.0
        %748 = vmatprep.subr.mxu0 0.0
        %749 = vmatpush1.msra.mxu0 0.0
        %750 = vmatprep.subr.mxu0 0.0
        %751 = vmatpush1.msra.mxu0 0.0
        %752 = vmatprep.subr.mxu0 0.0
        %753 = vmatpush1.msra.mxu0 0.0
        %754 = vmatprep.subr.mxu0 0.0
        %755 = vmatpush1.msra.mxu0 0.0
        %756 = vmatprep.subr.mxu0 0.0
        %757 = vmatpush1.msra.mxu0 0.0
        %758 = vmatprep.subr.mxu0 0.0
        %759 = vmatpush1.msra.mxu0 0.0
        %760 = vmatprep.subr.mxu0 0.0
        %761 = vmatpush1.msra.mxu0 0.0
        %762 = vmatprep.subr.mxu0 0.0
        %763 = vmatpush1.msra.mxu0 0.0
        %764 = vmatprep.subr.mxu0 0.0
        %765 = vmatpush1.msra.mxu0 0.0
        %766 = vmatprep.subr.mxu0 0.0
        %767 = vmatpush1.msra.mxu0 0.0
        %768 = vmatprep.subr.mxu0 0.0
        %769 = vmatpush1.msra.mxu0 0.0
        %770 = vmatprep.subr.mxu0 0.0
        %771 = vmatpush1.msra.mxu0 0.0
        %772 = vmatprep.subr.mxu0 0.0
        %773 = vmatpush1.msra.mxu0 %v740
        %774 = vmatprep.subr.mxu0 0.0
        %775 = vmatpush2.msra.mxu0 0.0
        %776 = vmatprep.subr.mxu0 0.0
        %777 = vmatpush2.msra.mxu0 0.0
        %778 = vmatprep.subr.mxu0 0.0
        %779 = vmatpush2.msra.mxu0 0.0
        %780 = vmatprep.subr.mxu0 0.0
        %781 = vmatpush2.msra.mxu0 0.0
        %782 = vmatprep.subr.mxu0 0.0
        %783 = vmatpush2.msra.mxu0 0.0
        %784 = vmatprep.subr.mxu0 0.0
        %785 = vmatpush2.msra.mxu0 0.0
        %786 = vmatprep.subr.mxu0 0.0
        %787 = vmatpush2.msra.mxu0 0.0
        %788 = vmatprep.subr.mxu0 0.0
        %789 = vmatpush2.msra.mxu0 0.0
        %790 = vmatprep.subr.mxu0 0.0
        %791 = vmatpush2.msra.mxu0 0.0
        %792 = vmatprep.subr.mxu0 0.0
        %793 = vmatpush2.msra.mxu0 0.0
        %794 = vmatprep.subr.mxu0 0.0
        %795 = vmatpush2.msra.mxu0 0.0
        %796 = vmatprep.subr.mxu0 0.0
        %797 = vmatpush2.msra.mxu0 0.0
        %798 = vmatprep.subr.mxu0 0.0
        %799 = vmatpush2.msra.mxu0 0.0
        %800 = vmatprep.subr.mxu0 0.0
        %801 = vmatpush2.msra.mxu0 0.0
        %802 = vmatprep.subr.mxu0 0.0
        %803 = vmatpush2.msra.mxu0 0.0
        %804 = vmatprep.subr.mxu0 0.0
        %805 = vmatpush2.msra.mxu0 0.0
        %806 = vmatprep.mubr.f32.mxu0 0.0
        %807 = vmatmul.mubr.f32.gmra.mxu0 %v738
        %v808 = vpop.f32.mrf.mxu0
        %v809 = vadd.f32 0.0, %v808
        %v810 = vpop.f32.mrf.mxu0
        %811 = vdwg.mxu0
        %v812 = vadd.f32 %v734, %v809
        %813 = vrot.lane.b32.xlu0 %v180, 120
        %v814 = vpop.permute.xlu0 %813
        %v816 = vsel %vm193, %v189, 0
        %v818 = vsel %vm197, %v814, 0
        %820 = vmatprep.subr.mxu0 0.0
        %821 = vmatpush1.msra.mxu0 0.0
        %822 = vmatprep.subr.mxu0 0.0
        %823 = vmatpush1.msra.mxu0 0.0
        %824 = vmatprep.subr.mxu0 0.0
        %825 = vmatpush1.msra.mxu0 0.0
        %826 = vmatprep.subr.mxu0 0.0
        %827 = vmatpush1.msra.mxu0 0.0
        %828 = vmatprep.subr.mxu0 0.0
        %829 = vmatpush1.msra.mxu0 0.0
        %830 = vmatprep.subr.mxu0 0.0
        %831 = vmatpush1.msra.mxu0 0.0
        %832 = vmatprep.subr.mxu0 0.0
        %833 = vmatpush1.msra.mxu0 0.0
        %834 = vmatprep.subr.mxu0 0.0
        %835 = vmatpush1.msra.mxu0 0.0
        %836 = vmatprep.subr.mxu0 0.0
        %837 = vmatpush1.msra.mxu0 0.0
        %838 = vmatprep.subr.mxu0 0.0
        %839 = vmatpush1.msra.mxu0 0.0
        %840 = vmatprep.subr.mxu0 0.0
        %841 = vmatpush1.msra.mxu0 0.0
        %842 = vmatprep.subr.mxu0 0.0
        %843 = vmatpush1.msra.mxu0 0.0
        %844 = vmatprep.subr.mxu0 0.0
        %845 = vmatpush1.msra.mxu0 0.0
        %846 = vmatprep.subr.mxu0 0.0
        %847 = vmatpush1.msra.mxu0 0.0
        %848 = vmatprep.subr.mxu0 0.0
        %849 = vmatpush1.msra.mxu0 0.0
        %850 = vmatprep.subr.mxu0 0.0
        %851 = vmatpush1.msra.mxu0 %v818
        %852 = vmatprep.subr.mxu0 0.0
        %853 = vmatpush2.msra.mxu0 0.0
        %854 = vmatprep.subr.mxu0 0.0
        %855 = vmatpush2.msra.mxu0 0.0
        %856 = vmatprep.subr.mxu0 0.0
        %857 = vmatpush2.msra.mxu0 0.0
        %858 = vmatprep.subr.mxu0 0.0
        %859 = vmatpush2.msra.mxu0 0.0
        %860 = vmatprep.subr.mxu0 0.0
        %861 = vmatpush2.msra.mxu0 0.0
        %862 = vmatprep.subr.mxu0 0.0
        %863 = vmatpush2.msra.mxu0 0.0
        %864 = vmatprep.subr.mxu0 0.0
        %865 = vmatpush2.msra.mxu0 0.0
        %866 = vmatprep.subr.mxu0 0.0
        %867 = vmatpush2.msra.mxu0 0.0
        %868 = vmatprep.subr.mxu0 0.0
        %869 = vmatpush2.msra.mxu0 0.0
        %870 = vmatprep.subr.mxu0 0.0
        %871 = vmatpush2.msra.mxu0 0.0
        %872 = vmatprep.subr.mxu0 0.0
        %873 = vmatpush2.msra.mxu0 0.0
        %874 = vmatprep.subr.mxu0 0.0
        %875 = vmatpush2.msra.mxu0 0.0
        %876 = vmatprep.subr.mxu0 0.0
        %877 = vmatpush2.msra.mxu0 0.0
        %878 = vmatprep.subr.mxu0 0.0
        %879 = vmatpush2.msra.mxu0 0.0
        %880 = vmatprep.subr.mxu0 0.0
        %881 = vmatpush2.msra.mxu0 0.0
        %882 = vmatprep.subr.mxu0 0.0
        %883 = vmatpush2.msra.mxu0 0.0
        %884 = vmatprep.mubr.f32.mxu0 0.0
        %885 = vmatmul.mubr.f32.gmra.mxu0 %v816
        %v886 = vpop.f32.mrf.mxu0
        %v887 = vadd.f32 0.0, %v886
        %v888 = vpop.f32.mrf.mxu0
        %889 = vdwg.mxu0
        %v890 = vadd.f32 %v812, %v887
        %v891 = vld [vmem:[%s2] sm:$0xf]
        %893 = vset.pattern.permute.xlu0 0
        %894 = vperm.xlu0 %893, %v891
        %v895 = vpop.permute.xlu0 %894
        %v897 = vadd.f32 %v890, %v895
        %vm898 = vcmask 125952
        %899 = vst.msk [vmem:[%s175] sm:$0xf] %vm898, %v897
        %s900 = sand.u32 %s107, 1
        %s901 = scalar_lea.sflag [#allocation3], %s900
        %s902 = sand.u32 %s107, 1
        %s903 = smul.addr %s902, 4
        %s904 = scalar_lea.vmem [#allocation2], %s903
        // Predicated region
        $region33: #{tpu_custom_call.1} parent=31 // pred_check
          %p905 = pneg %p117
        $region34: #{tpu_custom_call.1} parent=31 // pred_check_branch
          %907 = sbr.rel (%p905) target = $region36
        $region35: #{tpu_custom_call.1} parent=31 // pred_region
          %s909 = ssub.s32 64, 64
          %910 = vsyncadd %s901, %s909
          %s911 = sadd.s32 %s22, %s21
          %s912 = smul.addr %s911, 64
          %s913 = scalar_lea.hbm %s3, %s912
          %s915 = sshll.u32 %s904, 4
          %s916 = int_to_ptr.vmem [resolvable:$true] %s915
          %918 = dma.vmem_to_hbm [thread:$0]  %s916, 64, %s913, %s901
        $region36: #{tpu_custom_call.1} parent=31 // pred_fallthru
          _
      $region32: #{tpu_custom_call.1} parent=5 // pred_fallthru
        _
      %p919 = scmp.le.s32.totalorder 2, %s12
      // Predicated region
      $region37: #{tpu_custom_call.1} parent=5 // pred_check
        %p920 = pneg %p919
      $region38: #{tpu_custom_call.1} parent=5 // pred_check_branch
        %922 = sbr.rel (%p920) target = $region40
      $region39: #{tpu_custom_call.1} parent=5 // pred_region
        %s923 = ssub.s32 %s12, 2
        // Predicated region
        $region41: #{tpu_custom_call.1} parent=39 // pred_check
          %p924 = pneg %p123
        $region42: #{tpu_custom_call.1} parent=39 // pred_check_branch
          %926 = sbr.rel (%p924) target = $region44
        $region43: #{tpu_custom_call.1} parent=39 // pred_region
          %s927 = sand.u32 %s108, 1
          %s928 = scalar_lea.sflag [#allocation3], %s927
          %s929 = sand.u32 %s108, 1
          %s930 = smul.addr %s929, 4
          %s931 = scalar_lea.vmem [#allocation2], %s930
          %932 = dma.done %s928, 64
        $region44: #{tpu_custom_call.1} parent=39 // pred_fallthru
          _
      $region40: #{tpu_custom_call.1} parent=5 // pred_fallthru
        _
    $region6: #{tpu_custom_call.1} parent=1 // loop_footer
      %s16 = sadd.s32 1, %s12
    $region7: #{tpu_custom_call.1} parent=1 // loop_footer_branch
      %11 = sbr.rel target = $region3
    $region8: #{tpu_custom_call.1} parent=1 // loop_exit
      _
    %933 = vsyncpa [#allocation3], 1
    %s934 = scalar_lea.sflag [#allocation3], 1
    %935 = vsyncpa %s934, 1

</llo_original>
